<compile_context>
chip_gen: v7x
topology: tpu7x:2x2x1
jax: 0.10.0
libtpu: 0.0.40
codegen_flags: <defaults>
</compile_context>

<pallas_src>
import jax
import jax.numpy as jnp
import numpy as np
from jax.experimental import pallas as pl
from jax.experimental.pallas import tpu as pltpu

IN_DIM = 32
OUT_DIM = 400


def _round_up(n, m):
    return ((n + m - 1) // m) * m


def _folded_gemm_kernel(x_ref, w_ref, b_ref, o_ref):
    # Cast in registers (VPU, hidden under the DMA), single MXU pass with f32
    # accumulation, f32 bias add, lane-width-400 store (3 of 4 lane groups unmasked).
    x = x_ref[...].astype(jnp.bfloat16)
    acc = jnp.dot(x, w_ref[...], preferred_element_type=jnp.float32)
    o_ref[...] = (acc + b_ref[...]).astype(o_ref.dtype)


def fold_params(params):
    """Collapse the purely-affine 3-layer chain into one (32, 400) affine map.

    Call ONCE (outside the per-step path); the forward takes the folded result.
    Returns (w_bf16 (32,400), b_f32 (1,400)).
    """
    w1, w2, w3 = params["w1"], params["w2"], params["w3"]
    b1, b2, b3 = params["b1"], params["b2"], params["b3"]
    w = (w1 @ w2) @ w3                    # (32, 400) f32
    b = (b1 @ w2 + b2) @ w3 + b3          # (1, 400)  f32
    return w.astype(jnp.bfloat16), b.astype(jnp.float32)


def linear_net_controller(x, w_folded, b_folded, *, batch_tile=1024):
    """Forward pass of LinearNetController.

    x:        (B, 32) float32
    w_folded: (32, 400) bfloat16   (from fold_params)
    b_folded: (1, 400)  float32    (from fold_params)
    returns:  (B, 400)  float32    (Flatten is identity on 2-D activations)
    """
    B = x.shape[0]

    # Sublane-multiple batch tile. x stays f32 in VMEM (bf16 cast is register
    # level), so a multiple of 8 is sufficient; batch_tile itself is already a
    # multiple of 16. No batch padding: the ragged last block is masked.
    tb = min(batch_tile, _round_up(B, 8))
    # v7x: make sure mid-size batches give >=2 parallel grid steps so both
    # TensorCores get work (harmless on v5e/v6e).
    if B > 512 and (B + tb - 1) // tb == 1:
        tb = _round_up((B + 1) // 2, 8)
    grid = (pl.cdiv(B, tb),)

    return pl.pallas_call(
        _folded_gemm_kernel,
        out_shape=jax.ShapeDtypeStruct((B, OUT_DIM), jnp.float32),
        grid_spec=pltpu.PrefetchScalarGridSpec(
            num_scalar_prefetch=0,
            grid=grid,
            in_specs=[
                pl.BlockSpec((tb, IN_DIM), lambda i: (i, 0)),        # x tile (f32)
                pl.BlockSpec((IN_DIM, OUT_DIM), lambda i: (0, 0)),   # W resident
                pl.BlockSpec((1, OUT_DIM), lambda i: (0, 0)),        # b resident
            ],
            out_specs=pl.BlockSpec((tb, OUT_DIM), lambda i: (i, 0)),
        ),
        compiler_params=pltpu.CompilerParams(
            dimension_semantics=("parallel",),
        ),
    )(x, w_folded, b_folded)


def init_params(key):
    """Deterministic init mirroring init_sequence():
    kaiming_uniform_ for 2-D weights (bound = sqrt(6 / fan_in)), zeros for biases."""
    dims = [(32, 100), (100, 200), (200, 400)]
    params = {}
    keys = jax.random.split(key, len(dims))
    for i, ((fan_in, fan_out), k) in enumerate(zip(dims, keys), start=1):
        bound = float(np.sqrt(6.0 / fan_in))
        params[f"w{i}"] = jax.random.uniform(
            k, (fan_in, fan_out), jnp.float32, minval=-bound, maxval=bound)
        params[f"b{i}"] = jnp.zeros((1, fan_out), jnp.float32)
    return params


if __name__ == "__main__":
    key = jax.random.PRNGKey(0)
    k_params, k_x = jax.random.split(key)

    params = init_params(k_params)
    B = 8
    x = jax.random.normal(k_x, (B, IN_DIM), jnp.float32)

    # Fold the affine chain ONCE, outside the per-call path.
    w_folded, b_folded = fold_params(params)
    w_folded = jax.block_until_ready(w_folded)
    b_folded = jax.block_until_ready(b_folded)

    fwd = jax.jit(lambda xx: linear_net_controller(xx, w_folded, b_folded))
    y = jax.block_until_ready(fwd(x))

    # Pure-JAX f32 reference of the original un-folded 3-layer chain.
    ref = x
    for i in (1, 2, 3):
        ref = ref @ params[f"w{i}"] + params[f"b{i}"]

    # Tolerance sized for bf16 inputs/weights with f32 accumulation.
    np.testing.assert_allclose(np.asarray(y), np.asarray(ref), rtol=5e-2, atol=1e-1)

    assert y.shape == (B, OUT_DIM)
    print("KERNEL_OK")
</pallas_src>

<mosaic_0001>
module attributes {stable_mosaic.version = 11 : i64} {
  func.func @_folded_gemm_kernel(%arg0: i32, %arg1: memref<8x32xf32, #tpu.memory_space<vmem>>, %arg2: memref<32x400xbf16, #tpu.memory_space<vmem>>, %arg3: memref<1x400xf32, #tpu.memory_space<vmem>>, %arg4: memref<8x400xf32, #tpu.memory_space<vmem>>) attributes {dimension_semantics = [#tpu.dimension_semantics<parallel>], iteration_bounds = array<i64: 1>, scalar_prefetch = 0 : i64, scratch_operands = 0 : i64, tpu.core_type = #tpu.core_type<tc>, window_params = [{transform_indices = @transform_0, window_bounds = array<i64: 8, 32>}, {pipeline_mode = #tpu.pipeline_mode<synchronous>, transform_indices = @transform_1, window_bounds = array<i64: 32, 400>}, {pipeline_mode = #tpu.pipeline_mode<synchronous>, transform_indices = @transform_2, window_bounds = array<i64: 1, 400>}, {transform_indices = @transform_3, window_bounds = array<i64: 8, 400>}]} {
    %c0 = arith.constant 0 : index
    %c0_0 = arith.constant 0 : index
    %0 = vector.load %arg1[%c0, %c0_0] : memref<8x32xf32, #tpu.memory_space<vmem>>, vector<8x32xf32>
    %1 = arith.truncf %0 : vector<8x32xf32> to vector<8x32xbf16>
    %c0_1 = arith.constant 0 : index
    %c0_2 = arith.constant 0 : index
    %2 = vector.load %arg2[%c0_1, %c0_2] : memref<32x400xbf16, #tpu.memory_space<vmem>>, vector<32x400xbf16>
    %cst = arith.constant dense<0.000000e+00> : vector<8x400xf32>
    %3 = tpu.matmul %1, %2, %cst {dimension_numbers = #tpu.dot_dimension_numbers<[1], [0], [0], [1], [0, 0, 1, 1], [], []>} : vector<8x32xbf16>, vector<32x400xbf16>, vector<8x400xf32> -> vector<8x400xf32>
    %c0_3 = arith.constant 0 : index
    %c0_4 = arith.constant 0 : index
    %4 = vector.load %arg3[%c0_3, %c0_4] : memref<1x400xf32, #tpu.memory_space<vmem>>, vector<1x400xf32>
    %5 = vector.broadcast %4 : vector<1x400xf32> to vector<8x400xf32>
    %6 = arith.addf %3, %5 : vector<8x400xf32>
    %c0_5 = arith.constant 0 : index
    %c0_6 = arith.constant 0 : index
    %7 = vector.load %arg4[%c0_5, %c0_6] : memref<8x400xf32, #tpu.memory_space<vmem>>, vector<8x400xf32>
    tpu.vector_store %arg4[%c0_5, %c0_6], %6 {strides = array<i32>} : memref<8x400xf32, #tpu.memory_space<vmem>>, vector<8x400xf32>,
    return
  }
  func.func @transform_0(%arg0: i32) -> (i32, i32) {
    %c0_i32 = arith.constant 0 : i32
    %c0_i32_0 = arith.constant 0 : i32
    return %arg0, %c0_i32 : i32, i32
  }
  func.func @transform_1(%arg0: i32) -> (i32, i32) {
    %c0_i32 = arith.constant 0 : i32
    %c0_i32_0 = arith.constant 0 : i32
    %c0_i32_1 = arith.constant 0 : i32
    return %c0_i32, %c0_i32_0 : i32, i32
  }
  func.func @transform_2(%arg0: i32) -> (i32, i32) {
    %c0_i32 = arith.constant 0 : i32
    %c0_i32_0 = arith.constant 0 : i32
    %c0_i32_1 = arith.constant 0 : i32
    return %c0_i32, %c0_i32_0 : i32, i32
  }
  func.func @transform_3(%arg0: i32) -> (i32, i32) {
    %c0_i32 = arith.constant 0 : i32
    %c0_i32_0 = arith.constant 0 : i32
    return %arg0, %c0_i32 : i32, i32
  }
}

</mosaic_0001>

<llo_original>
// kernel: _lambda_.1
$region0: #{_lambda_.1}
  #allocation0 [shape = 'u32[]', space=smem, size = 0x4, offset = 0x4, fixed_abs, tag = 'smem constant byte address 0x4 - core index']
  #allocation1 [shape = 'u32[144,128]{1,0:T(1,128)}', space=vmem, size = 0x12000, scoped, tag = 'internal scratch']
  %s0 = inlined_call_operand.vmem [shape: f32[8,32], index: 0, kind: input, shape index: {}]
  %s1 = inlined_call_operand.vmem [shape: bf16[32,400], index: 1, kind: input, shape index: {}]
  %s2 = inlined_call_operand.vmem [shape: f32[1,400], index: 2, kind: input, shape index: {}]
  %s3 = inlined_call_operand.hbm [shape: f32[8,400], index: 3, kind: output, shape index: {}]
  %s4 = sld [smem:[#allocation0]]
  $region22: #{_lambda_.1} parent=0
    _
  %s6 = ssub.s32 1, %s4
  %s7 = scalar_select 0, %s6, %s4
  $region1: #{_lambda_.1} parent=0
    #allocation2 [shape = 'u8[16384]{0}', space=vmem, size = 0x4000, scoped, tag = 'output window, operand 0, single buffered']
    #allocation3 [shape = 's32[1]{0}', space=sflag, size = 0x4, scoped, tag = 'scoped memory for _lambda_.1']
    %8 = vsyncpa [#allocation3], 0
    // Predicated region
    $region2: #{_lambda_.1} parent=1 // pred_check
      _
    $region3: #{_lambda_.1} parent=1 // pred_check_branch
      %10 = sbr.rel (0) target = $region5
    $region4: #{_lambda_.1} parent=1 // pred_region
      _
    $region5: #{_lambda_.1} parent=1 // pred_fallthru
      _
    // Predicated region
    $region6: #{_lambda_.1} parent=1 // pred_check
      _
    $region7: #{_lambda_.1} parent=1 // pred_check_branch
      %12 = sbr.rel (0) target = $region9
    $region8: #{_lambda_.1} parent=1 // pred_region
      _
    $region9: #{_lambda_.1} parent=1 // pred_fallthru
      _
    // Predicated region
    $region10: #{_lambda_.1} parent=1 // pred_check
      _
    $region11: #{_lambda_.1} parent=1 // pred_check_branch
      %14 = sbr.rel (0) target = $region13
    $region12: #{_lambda_.1} parent=1 // pred_region
      _
    $region13: #{_lambda_.1} parent=1 // pred_fallthru
      _
    %v16 = vld [vmem:[%s0] sm:$0xff]
    %v17 = vpack.c.bf16 %v16, %v16
    %v18 = vld [vmem:[%s1] sm:$0xff]
    %v19 = vld [vmem:[%s1 + $0x8] sm:$0xff]
    %v20 = vld [vmem:[%s1 + $0x10] sm:$0xff]
    %v21 = vld [vmem:[%s1 + $0x18] sm:$0xff]
    %v22 = vld [vmem:[%s1 + $0x20] sm:$0xff]
    %v23 = vld [vmem:[%s1 + $0x28] sm:$0xff]
    %v24 = vld [vmem:[%s1 + $0x30] sm:$0xff]
    %v25 = vld [vmem:[%s1 + $0x38] sm:$0xff]
    %v26 = vld [vmem:[%s2] sm:$0xf]
    %v28 = vlaneseq
    %v29 = vshrl.u32 %v28, 7
    %v30 = vsub.s32 0, %v29
    %v31 = vrot.slane %v26, %v30
    %v32 = vlaneseq
    %v33 = vshrl.u32 %v32, 7
    %v34 = vsub.s32 1, %v33
    %v35 = vrot.slane %v26, %v34
    %v36 = vlaneseq
    %v37 = vshrl.u32 %v36, 7
    %v38 = vsub.s32 2, %v37
    %v39 = vrot.slane %v26, %v38
    %v40 = vlaneseq
    %v41 = vshrl.u32 %v40, 7
    %v42 = vsub.s32 3, %v41
    %v43 = vrot.slane %v26, %v42
    %v56 = vunpack.c.l.b16 %v18
    %v57 = vunpack.c.h.b16 %v18
    %v58 = vunpack.c.l.b16 %v19
    %v59 = vunpack.c.h.b16 %v19
    %v60 = vunpack.c.l.b16 %v20
    %v61 = vunpack.c.h.b16 %v20
    %v62 = vunpack.c.l.b16 %v21
    %v63 = vunpack.c.h.b16 %v21
    %v64 = vunpack.c.l.b16 %v22
    %v65 = vunpack.c.h.b16 %v22
    %v66 = vunpack.c.l.b16 %v23
    %v67 = vunpack.c.h.b16 %v23
    %v68 = vunpack.c.l.b16 %v24
    %v69 = vunpack.c.h.b16 %v24
    %v70 = vunpack.c.l.b16 %v25
    %v71 = vunpack.c.h.b16 %v25
    %v72 = vpack.c.b16 %v60, %v56
    %v73 = vpack.c.b16 %v61, %v57
    %v74 = vpack.c.b16 %v62, %v58
    %v75 = vpack.c.b16 %v63, %v59
    %v76 = vpack.c.b16 %v68, %v64
    %v77 = vpack.c.b16 %v69, %v65
    %v78 = vpack.c.b16 %v70, %v66
    %v79 = vpack.c.b16 %v71, %v67
    %vm88 = vcmask 261120
    %v90 = vsel %vm88, %v17, 0
    %92 = vmatprep.subr.bf16.mxu0 %v73
    %93 = vmatpush1.bf16.msra.mxu0 %v72
    %94 = vmatprep.subr.bf16.mxu0 %v77
    %95 = vmatpush1.bf16.msra.mxu0 %v76
    %96 = vmatprep.subr.bf16.mxu0 0
    %97 = vmatpush1.bf16.msra.mxu0 0
    %98 = vmatprep.subr.bf16.mxu0 0
    %99 = vmatpush1.bf16.msra.mxu0 0
    %100 = vmatprep.subr.bf16.mxu0 0
    %101 = vmatpush1.bf16.msra.mxu0 0
    %102 = vmatprep.subr.bf16.mxu0 0
    %103 = vmatpush1.bf16.msra.mxu0 0
    %104 = vmatprep.subr.bf16.mxu0 0
    %105 = vmatpush1.bf16.msra.mxu0 0
    %106 = vmatprep.subr.bf16.mxu0 0
    %107 = vmatpush1.bf16.msra.mxu0 0
    %108 = vmatprep.subr.bf16.mxu0 0
    %109 = vmatpush1.bf16.msra.mxu0 0
    %110 = vmatprep.subr.bf16.mxu0 0
    %111 = vmatpush1.bf16.msra.mxu0 0
    %112 = vmatprep.subr.bf16.mxu0 0
    %113 = vmatpush1.bf16.msra.mxu0 0
    %114 = vmatprep.subr.bf16.mxu0 0
    %115 = vmatpush1.bf16.msra.mxu0 0
    %116 = vmatprep.subr.bf16.mxu0 0
    %117 = vmatpush1.bf16.msra.mxu0 0
    %118 = vmatprep.subr.bf16.mxu0 0
    %119 = vmatpush1.bf16.msra.mxu0 0
    %120 = vmatprep.subr.bf16.mxu0 0
    %121 = vmatpush1.bf16.msra.mxu0 0
    %122 = vmatprep.subr.bf16.mxu0 0
    %123 = vmatpush1.bf16.msra.mxu0 0
    %124 = vmatprep.mubr.bf16.mxu0 0
    %125 = vmatmul.mubr.bf16.gmra.mrb[0].mxu0 %v90
    %v126 = vpop.f32.mrb[0].mxu0
    %v127 = vadd.f32 %v31, %v126
    %v128 = vpop.f32.mrb[0].mxu0
    %v129 = vadd.f32 %v35, %v128
    %v130 = vpop.f32.mrb[0].mxu0
    %v131 = vpop.f32.mrb[0].mxu0
    %132 = vdwg.mxu0
    %133 = vmatprep.subr.bf16.mxu0 %v75
    %134 = vmatpush1.bf16.msra.mxu0 %v74
    %135 = vmatprep.subr.bf16.mxu0 %v79
    %136 = vmatpush1.bf16.msra.mxu0 %v78
    %137 = vmatprep.subr.bf16.mxu0 0
    %138 = vmatpush1.bf16.msra.mxu0 0
    %139 = vmatprep.subr.bf16.mxu0 0
    %140 = vmatpush1.bf16.msra.mxu0 0
    %141 = vmatprep.subr.bf16.mxu0 0
    %142 = vmatpush1.bf16.msra.mxu0 0
    %143 = vmatprep.subr.bf16.mxu0 0
    %144 = vmatpush1.bf16.msra.mxu0 0
    %145 = vmatprep.subr.bf16.mxu0 0
    %146 = vmatpush1.bf16.msra.mxu0 0
    %147 = vmatprep.subr.bf16.mxu0 0
    %148 = vmatpush1.bf16.msra.mxu0 0
    %149 = vmatprep.subr.bf16.mxu0 0
    %150 = vmatpush1.bf16.msra.mxu0 0
    %151 = vmatprep.subr.bf16.mxu0 0
    %152 = vmatpush1.bf16.msra.mxu0 0
    %153 = vmatprep.subr.bf16.mxu0 0
    %154 = vmatpush1.bf16.msra.mxu0 0
    %155 = vmatprep.subr.bf16.mxu0 0
    %156 = vmatpush1.bf16.msra.mxu0 0
    %157 = vmatprep.subr.bf16.mxu0 0
    %158 = vmatpush1.bf16.msra.mxu0 0
    %159 = vmatprep.subr.bf16.mxu0 0
    %160 = vmatpush1.bf16.msra.mxu0 0
    %161 = vmatprep.subr.bf16.mxu0 0
    %162 = vmatpush1.bf16.msra.mxu0 0
    %163 = vmatprep.subr.bf16.mxu0 0
    %164 = vmatpush1.bf16.msra.mxu0 0
    %165 = vmatprep.mubr.bf16.mxu0 0
    %166 = vmatmul.mubr.bf16.gmra.mrb[0].mxu0 %v90
    %v167 = vpop.f32.mrb[0].mxu0
    %v168 = vadd.f32 %v39, %v167
    %v169 = vpop.f32.mrb[0].mxu0
    %v170 = vadd.f32 %v43, %v169
    %v171 = vpop.f32.mrb[0].mxu0
    %v172 = vpop.f32.mrb[0].mxu0
    %173 = vdwg.mxu0
    %174 = vst [vmem:[#allocation2] sm:$0xff] %v127
    %175 = vst [vmem:[#allocation2 + $0x8] sm:$0xff] %v129
    %176 = vst [vmem:[#allocation2 + $0x10] sm:$0xff] %v168
    %vm177 = vcmask 130048
    %178 = vst.msk [vmem:[#allocation2 + $0x18] sm:$0xff] %vm177, %v170
    // Predicated region
    $region14: #{_lambda_.1} parent=1 // pred_check
      _
    $region15: #{_lambda_.1} parent=1 // pred_check_branch
      %180 = sbr.rel (0) target = $region17
    $region16: #{_lambda_.1} parent=1 // pred_region
      %s182 = ssub.s32 512, 512
      %183 = vsyncadd [#allocation3], %s182
      %s185 = sshll.u32 [#allocation2], 4
      %s186 = int_to_ptr.vmem [resolvable:$true] %s185
      %188 = dma.vmem_to_hbm [thread:$0]  %s186, 512, %s3, [#allocation3]
    $region17: #{_lambda_.1} parent=1 // pred_fallthru
      _
    // Predicated region
    $region18: #{_lambda_.1} parent=1 // pred_check
      _
    $region19: #{_lambda_.1} parent=1 // pred_check_branch
      %190 = sbr.rel (0) target = $region21
    $region20: #{_lambda_.1} parent=1 // pred_region
      %191 = dma.done [#allocation3], 512
    $region21: #{_lambda_.1} parent=1 // pred_fallthru
      _
    %192 = vsyncpa [#allocation3], 1

</llo_original>
